<compile_context>
chip_gen: v5e
topology: v5e:2x2
jax: 0.10.0
libtpu: 0.0.40
codegen_flags: <defaults>
</compile_context>

<pallas_src>
import math

import numpy as np
import jax
import jax.numpy as jnp
from jax import lax
from jax.experimental import pallas as pl
from jax.experimental.pallas import tpu as pltpu


def uniform_coverage(rank, n_features):
    """Same semantics as the PyTorch helper (tiled arange(rank))."""
    reps = np.zeros(n_features, dtype=np.int64)
    place = np.arange(rank)
    for i in range(0, n_features, rank):
        reps[i:i + rank] = place[: min(rank, n_features - i)]
    return reps


def make_tied_tensor_params(key, full_tensor_size, initial_sparsity,
                            sub_kernel_granularity=False):
    """Deterministically build (bank, weight_alloc) mirroring TiedTensor.__init__."""
    ndim = len(full_tensor_size)
    assert ndim in (2, 4), "only 2D or 4D tensors supported"
    n_alloc = (int(np.prod(full_tensor_size)) if sub_kernel_granularity
               else int(np.prod(full_tensor_size[:2])))
    num_weights = int(round((1.0 - initial_sparsity) * n_alloc))

    k_perm, k_bank = jax.random.split(key)

    # weight_alloc[shuffled_indices] = uniform_coverage(num_weights, n_alloc)
    perm = jax.random.permutation(k_perm, n_alloc)
    reps = jnp.asarray(uniform_coverage(num_weights, n_alloc), dtype=jnp.int32)
    weight_alloc = jnp.zeros((n_alloc,), jnp.int32).at[perm].set(reps)

    trailing = () if sub_kernel_granularity else tuple(full_tensor_size[2:])
    stdv = 1.0 / math.sqrt(float(np.prod(full_tensor_size[1:])))
    bank = jax.random.uniform(k_bank, (num_weights,) + trailing,
                              minval=-stdv, maxval=stdv, dtype=jnp.float32)
    bank = bank.at[0].set(0.0)  # init_parameters(): bank[0] = 0
    return bank, weight_alloc


def _round_up(x, m):
    return (x + m - 1) // m * m


def _cdiv(a, b):
    return -(-a // b)


def _onehot_gather_kernel(idx_ref, bank_t_ref, out_ref, acc_ref):
    # idx_ref   : VMEM (1, TM)  int32 — this block's gather indices (lane-dense)
    # bank_t_ref: VMEM (Dp, TK) f32   — transposed bank tile (lanes = bank rows)
    # out_ref   : VMEM (Dp, TM) f32   — transposed, lane-dense gathered block
    # acc_ref   : VMEM (Dp, TM) f32   — accumulator across bank tiles
    k = pl.program_id(1)
    tk = bank_t_ref.shape[1]
    tm = out_ref.shape[1]

    @pl.when(k == 0)
    def _():
        acc_ref[...] = jnp.zeros_like(acc_ref)

    # one_hot_T[w, j] = (weight_alloc[j] == k*TK + w)   -> (TK, TM)
    w_ids = k * tk + lax.broadcasted_iota(jnp.int32, (tk, tm), 0)
    onehot_t = (w_ids == idx_ref[...]).astype(bank_t_ref.dtype)

    # Gather via MXU: (Dp, TK) @ (TK, TM) -> (Dp, TM).  fp32 contraction keeps
    # the gathered values exact (one-hot is bf16-exact).
    acc_ref[...] += jnp.dot(bank_t_ref[...], onehot_t,
                            preferred_element_type=jnp.float32,
                            precision=lax.Precision.HIGHEST)

    @pl.when(k == pl.num_programs(1) - 1)
    def _():
        out_ref[...] = acc_ref[...].astype(out_ref.dtype)


def tied_tensor_forward(bank, weight_alloc, full_tensor_size,
                        *, block_cols=512, max_bank_tile=2048):
    """Pallas implementation of TiedTensor.forward()."""
    n_alloc = int(weight_alloc.shape[0])
    num_weights = int(bank.shape[0])
    trailing = bank.shape[1:]
    D = int(np.prod(trailing)) if len(trailing) else 1

    # --- transposed, padded bank: (Dp, Wp), lane axis = bank-row index -------
    Dp = _round_up(D, 8)
    tk = min(_round_up(num_weights, 128), max_bank_tile)
    Wp = _round_up(num_weights, tk)
    n_k = Wp // tk

    bank_t = bank.reshape(num_weights, D).T                        # (D, W)
    bank_t = jnp.pad(bank_t, ((0, Dp - D), (0, Wp - num_weights)))  # (Dp, Wp)

    # --- output-column tiling: lane-dense, minimal padding, busy grid --------
    n_blocks = max(1, _cdiv(n_alloc, block_cols))
    tm = _round_up(_cdiv(n_alloc, n_blocks), 128)   # lane-dense block width
    n_pad = _round_up(n_alloc, tm)
    n_blocks = n_pad // tm

    idx = weight_alloc.astype(jnp.int32).reshape(1, n_alloc)
    if n_pad != n_alloc:
        idx = jnp.pad(idx, ((0, 0), (0, n_pad - n_alloc)))  # pads gather bank[0]

    out_t = pl.pallas_call(
        _onehot_gather_kernel,
        out_shape=jax.ShapeDtypeStruct((Dp, n_pad), bank.dtype),
        grid_spec=pltpu.PrefetchScalarGridSpec(
            num_scalar_prefetch=0,
            grid=(n_blocks, n_k),
            in_specs=[
                pl.BlockSpec((1, tm), lambda b, k: (0, b)),     # indices
                pl.BlockSpec((Dp, tk), lambda b, k: (0, k)),    # bank tile
            ],
            out_specs=pl.BlockSpec((Dp, tm), lambda b, k: (0, b)),
            scratch_shapes=[pltpu.VMEM((Dp, tm), jnp.float32)],
        ),
        compiler_params=pltpu.CompilerParams(
            dimension_semantics=("parallel", "arbitrary")),
    )(idx, bank_t)

    gathered = out_t[:D, :n_alloc].T           # (n_alloc, D) = bank[weight_alloc]
    return gathered.reshape(tuple(full_tensor_size))


if __name__ == "__main__":
    k4, k2, k3 = jax.random.split(jax.random.PRNGKey(0), 3)

    # 4D conv-shaped case: full_tensor_size = (out_ch=8, in_ch=4, kh=3, kw=3),
    # 50% sparsity -> n_alloc = 32, num_weights = 16, bank (16, 3, 3).
    full_4d = (8, 4, 3, 3)
    bank4, alloc4 = make_tied_tensor_params(k4, full_4d, 0.5)
    y4 = jax.block_until_ready(tied_tensor_forward(bank4, alloc4, full_4d))
    ref4 = jnp.take(bank4, alloc4, axis=0).reshape(full_4d)
    assert y4.shape == full_4d and y4.dtype == jnp.float32
    np.testing.assert_allclose(np.asarray(y4), np.asarray(ref4),
                               rtol=1e-6, atol=1e-6)

    # 2D linear-shaped case: full_tensor_size = (16, 32), 75% sparsity
    #   -> n_alloc = 512, num_weights = 128, bank (128,).
    full_2d = (16, 32)
    bank2, alloc2 = make_tied_tensor_params(k2, full_2d, 0.75)
    y2 = jax.block_until_ready(tied_tensor_forward(bank2, alloc2, full_2d))
    ref2 = jnp.take(bank2, alloc2, axis=0).reshape(full_2d)
    assert y2.shape == full_2d and y2.dtype == jnp.float32
    np.testing.assert_allclose(np.asarray(y2), np.asarray(ref2),
                               rtol=1e-6, atol=1e-6)

    # Larger 2D case exercising a multi-block, multi-bank-tile grid:
    # (64, 128), 50% sparsity -> n_alloc = 8192, num_weights = 4096
    #   -> grid = (16 row-blocks, 2 bank tiles) with accumulation.
    full_big = (64, 128)
    bank3, alloc3 = make_tied_tensor_params(k3, full_big, 0.5)
    y3 = jax.block_until_ready(tied_tensor_forward(bank3, alloc3, full_big))
    ref3 = jnp.take(bank3, alloc3, axis=0).reshape(full_big)
    assert y3.shape == full_big and y3.dtype == jnp.float32
    np.testing.assert_allclose(np.asarray(y3), np.asarray(ref3),
                               rtol=1e-6, atol=1e-6)

    print("KERNEL_OK")
</pallas_src>

<mosaic_0001>
module attributes {stable_mosaic.version = 11 : i64} {
  func.func @_onehot_gather_kernel(%arg0: i32, %arg1: i32, %arg2: memref<1x128xi32, #tpu.memory_space<vmem>>, %arg3: memref<16x128xf32, #tpu.memory_space<vmem>>, %arg4: memref<16x128xf32, #tpu.memory_space<vmem>>, %arg5: memref<16x128xf32, #tpu.memory_space<vmem>>) attributes {dimension_semantics = [#tpu.dimension_semantics<parallel>, #tpu.dimension_semantics<arbitrary>], iteration_bounds = array<i64: 1, 1>, scalar_prefetch = 0 : i64, scratch_operands = 1 : i64, tpu.core_type = #tpu.core_type<tc>, window_params = [{transform_indices = @transform_0, window_bounds = array<i64: 1, 128>}, {transform_indices = @transform_1, window_bounds = array<i64: 16, 128>}, {transform_indices = @transform_2, window_bounds = array<i64: 16, 128>}]} {
    %c0_i32 = arith.constant 0 : i32
    %0 = arith.cmpi eq, %arg1, %c0_i32 : i32
    %1 = arith.extui %0 : i1 to i32
    %c0_i32_0 = arith.constant 0 : i32
    %2 = arith.cmpi ne, %1, %c0_i32_0 : i32
    scf.if %2 {
      %cst_10 = arith.constant 0.000000e+00 : f32
      %20 = vector.broadcast %cst_10 : f32 to vector<16x128xf32>
      %c0_11 = arith.constant 0 : index
      %c0_12 = arith.constant 0 : index
      %21 = vector.load %arg5[%c0_11, %c0_12] : memref<16x128xf32, #tpu.memory_space<vmem>>, vector<16x128xf32>
      tpu.vector_store %arg5[%c0_11, %c0_12], %20 {strides = array<i32>} : memref<16x128xf32, #tpu.memory_space<vmem>>, vector<16x128xf32>,
    } else {
    }
    %c128_i32 = arith.constant 128 : i32
    %3 = arith.muli %arg1, %c128_i32 : i32
    %4 = tpu.iota {dimensions = array<i32: 0>} : vector<128x128xi32>
    %5 = vector.broadcast %3 : i32 to vector<128x128xi32>
    %6 = arith.addi %5, %4 : vector<128x128xi32>
    %c0 = arith.constant 0 : index
    %c0_1 = arith.constant 0 : index
    %7 = vector.load %arg2[%c0, %c0_1] : memref<1x128xi32, #tpu.memory_space<vmem>>, vector<1x128xi32>
    %8 = vector.broadcast %7 : vector<1x128xi32> to vector<128x128xi32>
    %9 = arith.cmpi eq, %6, %8 : vector<128x128xi32>
    %10 = arith.extui %9 : vector<128x128xi1> to vector<128x128xi32>
    %11 = arith.sitofp %10 : vector<128x128xi32> to vector<128x128xf32>
    %c0_2 = arith.constant 0 : index
    %c0_3 = arith.constant 0 : index
    %12 = vector.load %arg5[%c0_2, %c0_3] : memref<16x128xf32, #tpu.memory_space<vmem>>, vector<16x128xf32>
    %c0_4 = arith.constant 0 : index
    %c0_5 = arith.constant 0 : index
    %13 = vector.load %arg3[%c0_4, %c0_5] : memref<16x128xf32, #tpu.memory_space<vmem>>, vector<16x128xf32>
    %cst = arith.constant dense<0.000000e+00> : vector<16x128xf32>
    %14 = tpu.matmul %13, %11, %cst {dimension_numbers = #tpu.dot_dimension_numbers<[1], [0], [0], [1], [0, 0, 1, 1], [], []>, precision = #tpu.contract_precision<fp32>} : vector<16x128xf32>, vector<128x128xf32>, vector<16x128xf32> -> vector<16x128xf32>
    %15 = arith.addf %12, %14 : vector<16x128xf32>
    %c0_6 = arith.constant 0 : index
    %c0_7 = arith.constant 0 : index
    %16 = vector.load %arg5[%c0_6, %c0_7] : memref<16x128xf32, #tpu.memory_space<vmem>>, vector<16x128xf32>
    tpu.vector_store %arg5[%c0_6, %c0_7], %15 {strides = array<i32>} : memref<16x128xf32, #tpu.memory_space<vmem>>, vector<16x128xf32>,
    %c0_i32_8 = arith.constant 0 : i32
    %17 = arith.cmpi eq, %arg1, %c0_i32_8 : i32
    %18 = arith.extui %17 : i1 to i32
    %c0_i32_9 = arith.constant 0 : i32
    %19 = arith.cmpi ne, %18, %c0_i32_9 : i32
    scf.if %19 {
      %c0_10 = arith.constant 0 : index
      %c0_11 = arith.constant 0 : index
      %20 = vector.load %arg5[%c0_10, %c0_11] : memref<16x128xf32, #tpu.memory_space<vmem>>, vector<16x128xf32>
      %c0_12 = arith.constant 0 : index
      %c0_13 = arith.constant 0 : index
      %21 = vector.load %arg4[%c0_12, %c0_13] : memref<16x128xf32, #tpu.memory_space<vmem>>, vector<16x128xf32>
      tpu.vector_store %arg4[%c0_12, %c0_13], %20 {strides = array<i32>} : memref<16x128xf32, #tpu.memory_space<vmem>>, vector<16x128xf32>,
    } else {
    }
    return
  }
  func.func @transform_0(%arg0: i32, %arg1: i32) -> (i32, i32) {
    %c0_i32 = arith.constant 0 : i32
    %c0_i32_0 = arith.constant 0 : i32
    return %c0_i32, %arg0 : i32, i32
  }
  func.func @transform_1(%arg0: i32, %arg1: i32) -> (i32, i32) {
    %c0_i32 = arith.constant 0 : i32
    %c0_i32_0 = arith.constant 0 : i32
    return %c0_i32, %arg1 : i32, i32
  }
  func.func @transform_2(%arg0: i32, %arg1: i32) -> (i32, i32) {
    %c0_i32 = arith.constant 0 : i32
    %c0_i32_0 = arith.constant 0 : i32
    return %c0_i32, %arg0 : i32, i32
  }
}

</mosaic_0001>

<llo_original>
// kernel: tpu_custom_call.1
$region0: #{tpu_custom_call.1}
  #allocation0 [shape = 'u32[]', space=smem, size = 0x4, offset = 0x4, fixed_abs, tag = 'smem constant byte address 0x4 - core index']
  #allocation1 [shape = 'u32[72,128]{1,0:T(1,128)}', space=vmem, size = 0x9000, scoped, tag = 'internal scratch']
  #allocation2 [shape = 'f32[16,128]{1,0:T(8,128)}', space=vmem, size = 0x2000, scoped, tag = 'scratch operand']
  %s0 = inlined_call_operand.hbm [shape: s32[1,128], index: 0, kind: input, shape index: {}]
  %s1 = inlined_call_operand.hbm [shape: f32[16,128], index: 1, kind: input, shape index: {}]
  %s2 = inlined_call_operand.hbm [shape: f32[16,128], index: 2, kind: output, shape index: {}]
  %s3 = sld [smem:[#allocation0]]
  $region34: #{tpu_custom_call.1} parent=0
    _
  %s5 = ssub.s32 1, %s3
  %s6 = scalar_select 0, %s5, %s3
  $region1: #{tpu_custom_call.1} parent=0
    #allocation3 [shape = 'u8[512]{0}', space=vmem, size = 0x400, scoped, tag = 'input window, operand 0, single buffered']
    #allocation4 [shape = 's32[1]{0}', space=sflag, size = 0x4, scoped, tag = 'scoped memory for tpu_custom_call.1']
    #allocation5 [shape = 's32[1]{0}', space=sflag, size = 0x4, scoped, tag = 'scoped memory for tpu_custom_call.1']
    #allocation6 [shape = 'u8[8192]{0}', space=vmem, size = 0x2000, scoped, tag = 'input window, operand 1, single buffered']
    #allocation7 [shape = 's32[1]{0}', space=sflag, size = 0x4, scoped, tag = 'scoped memory for tpu_custom_call.1']
    #allocation8 [shape = 'u8[8192]{0}', space=vmem, size = 0x2000, scoped, tag = 'output window, operand 0, single buffered']
    %7 = vsyncpa [#allocation4], 0
    %8 = vsyncpa [#allocation7], 0
    %9 = vsyncpa [#allocation5], 0
    // Predicated region
    $region2: #{tpu_custom_call.1} parent=1 // pred_check
      _
    $region3: #{tpu_custom_call.1} parent=1 // pred_check_branch
      %11 = sbr.rel (0) target = $region5
    $region4: #{tpu_custom_call.1} parent=1 // pred_region
      %13 = vsyncadd [#allocation4], 0
      %s15 = sshll.u32 %s0, 4
      %s16 = int_to_ptr.hbm [resolvable:$true] %s15
      %s17 = sshll.u32 [#allocation3], 4
      %s18 = int_to_ptr.vmem [resolvable:$true] %s17
      %20 = dma.hbm_to_vmem [thread:$0]  %s16, 16, %s18, [#allocation4]
    $region5: #{tpu_custom_call.1} parent=1 // pred_fallthru
      _
    // Predicated region
    $region6: #{tpu_custom_call.1} parent=1 // pred_check
      _
    $region7: #{tpu_custom_call.1} parent=1 // pred_check_branch
      %22 = sbr.rel (0) target = $region9
    $region8: #{tpu_custom_call.1} parent=1 // pred_region
      %24 = vsyncadd [#allocation7], 0
      %s25 = sshll.u32 %s1, 4
      %s26 = int_to_ptr.hbm [resolvable:$true] %s25
      %s27 = sshll.u32 [#allocation6], 4
      %s28 = int_to_ptr.vmem [resolvable:$true] %s27
      %33 = dma.hbm_to_vmem [thread:$0]  %s26, 256, %s28, [#allocation7], 128, 128, 8
    $region9: #{tpu_custom_call.1} parent=1 // pred_fallthru
      _
    // Predicated region
    $region10: #{tpu_custom_call.1} parent=1 // pred_check
      _
    $region11: #{tpu_custom_call.1} parent=1 // pred_check_branch
      %35 = sbr.rel (0) target = $region13
    $region12: #{tpu_custom_call.1} parent=1 // pred_region
      %37 = dma.done [#allocation4], 16
    $region13: #{tpu_custom_call.1} parent=1 // pred_fallthru
      _
    // Predicated region
    $region14: #{tpu_custom_call.1} parent=1 // pred_check
      _
    $region15: #{tpu_custom_call.1} parent=1 // pred_check_branch
      %39 = sbr.rel (0) target = $region17
    $region16: #{tpu_custom_call.1} parent=1 // pred_region
      %41 = dma.done [#allocation7], 256
    $region17: #{tpu_custom_call.1} parent=1 // pred_fallthru
      _
    %p42 = scmp.eq.s32.totalorder 0, 0
    // Predicated region
    $region18: #{tpu_custom_call.1} parent=1 // pred_check
      %p43 = pneg %p42
    $region19: #{tpu_custom_call.1} parent=1 // pred_check_branch
      %45 = sbr.rel (%p43) target = $region21
    $region20: #{tpu_custom_call.1} parent=1 // pred_region
      %46 = vst [vmem:[#allocation2] sm:$0xff] 0.0
      %47 = vst [vmem:[#allocation2 + $0x8] sm:$0xff] 0.0
    $region21: #{tpu_custom_call.1} parent=1 // pred_fallthru
      _
    %s48 = smul.u32 0, 128
    %v49 = vlaneseq
    %v50 = vshrl.u32 %v49, 7
    %v51 = vadd.s32 %v50, 8
    %v52 = vadd.s32 %v50, 16
    %v53 = vadd.s32 %v50, 24
    %v54 = vadd.s32 %v50, 32
    %v55 = vadd.s32 %v50, 40
    %v56 = vadd.s32 %v50, 48
    %v57 = vadd.s32 %v50, 56
    %v58 = vadd.s32 %v50, 64
    %v59 = vadd.s32 %v50, 72
    %v60 = vadd.s32 %v50, 80
    %v61 = vadd.s32 %v50, 88
    %v62 = vadd.s32 %v50, 96
    %v63 = vadd.s32 %v50, 104
    %v64 = vadd.s32 %v50, 112
    %v65 = vadd.s32 %v50, 120
    %v66 = vstv %s48
    %v67 = vadd.s32 %v66, %v50
    %v68 = vadd.s32 %v66, %v51
    %v69 = vadd.s32 %v66, %v52
    %v70 = vadd.s32 %v66, %v53
    %v71 = vadd.s32 %v66, %v54
    %v72 = vadd.s32 %v66, %v55
    %v73 = vadd.s32 %v66, %v56
    %v74 = vadd.s32 %v66, %v57
    %v75 = vadd.s32 %v66, %v58
    %v76 = vadd.s32 %v66, %v59
    %v77 = vadd.s32 %v66, %v60
    %v78 = vadd.s32 %v66, %v61
    %v79 = vadd.s32 %v66, %v62
    %v80 = vadd.s32 %v66, %v63
    %v81 = vadd.s32 %v66, %v64
    %v82 = vadd.s32 %v66, %v65
    %v83 = vld [vmem:[#allocation3] sm:$0x1]
    %v84 = vperm.slane %v83, 0
    %vm85 = vcmp.eq.s32.totalorder %v67, %v84
    %vm86 = vcmp.eq.s32.totalorder %v68, %v84
    %vm87 = vcmp.eq.s32.totalorder %v69, %v84
    %vm88 = vcmp.eq.s32.totalorder %v70, %v84
    %vm89 = vcmp.eq.s32.totalorder %v71, %v84
    %vm90 = vcmp.eq.s32.totalorder %v72, %v84
    %vm91 = vcmp.eq.s32.totalorder %v73, %v84
    %vm92 = vcmp.eq.s32.totalorder %v74, %v84
    %vm93 = vcmp.eq.s32.totalorder %v75, %v84
    %vm94 = vcmp.eq.s32.totalorder %v76, %v84
    %vm95 = vcmp.eq.s32.totalorder %v77, %v84
    %vm96 = vcmp.eq.s32.totalorder %v78, %v84
    %vm97 = vcmp.eq.s32.totalorder %v79, %v84
    %vm98 = vcmp.eq.s32.totalorder %v80, %v84
    %vm99 = vcmp.eq.s32.totalorder %v81, %v84
    %vm100 = vcmp.eq.s32.totalorder %v82, %v84
    %v101 = vsel %vm85, 1, 0
    %v102 = vsel %vm86, 1, 0
    %v103 = vsel %vm87, 1, 0
    %v104 = vsel %vm88, 1, 0
    %v105 = vsel %vm89, 1, 0
    %v106 = vsel %vm90, 1, 0
    %v107 = vsel %vm91, 1, 0
    %v108 = vsel %vm92, 1, 0
    %v109 = vsel %vm93, 1, 0
    %v110 = vsel %vm94, 1, 0
    %v111 = vsel %vm95, 1, 0
    %v112 = vsel %vm96, 1, 0
    %v113 = vsel %vm97, 1, 0
    %v114 = vsel %vm98, 1, 0
    %v115 = vsel %vm99, 1, 0
    %v116 = vsel %vm100, 1, 0
    %v117 = vcvt.s32.f32 %v101
    %v118 = vcvt.s32.f32 %v102
    %v119 = vcvt.s32.f32 %v103
    %v120 = vcvt.s32.f32 %v104
    %v121 = vcvt.s32.f32 %v105
    %v122 = vcvt.s32.f32 %v106
    %v123 = vcvt.s32.f32 %v107
    %v124 = vcvt.s32.f32 %v108
    %v125 = vcvt.s32.f32 %v109
    %v126 = vcvt.s32.f32 %v110
    %v127 = vcvt.s32.f32 %v111
    %v128 = vcvt.s32.f32 %v112
    %v129 = vcvt.s32.f32 %v113
    %v130 = vcvt.s32.f32 %v114
    %v131 = vcvt.s32.f32 %v115
    %v132 = vcvt.s32.f32 %v116
    %v133 = vld [vmem:[#allocation2] sm:$0xff]
    %v134 = vld [vmem:[#allocation2 + $0x8] sm:$0xff]
    %v135 = vld [vmem:[#allocation6] sm:$0xff]
    %v136 = vld [vmem:[#allocation6 + $0x8] sm:$0xff]
    %v137 = vand.u32 %v132, 4294901760
    %138 = vmatpush.msra.mxu0 %v137
    %v139 = vand.u32 %v131, 4294901760
    %140 = vmatpush.msra.mxu0 %v139
    %v141 = vand.u32 %v130, 4294901760
    %142 = vmatpush.msra.mxu0 %v141
    %v143 = vand.u32 %v129, 4294901760
    %144 = vmatpush.msra.mxu0 %v143
    %v145 = vand.u32 %v128, 4294901760
    %146 = vmatpush.msra.mxu0 %v145
    %v147 = vand.u32 %v127, 4294901760
    %148 = vmatpush.msra.mxu0 %v147
    %v149 = vand.u32 %v126, 4294901760
    %150 = vmatpush.msra.mxu0 %v149
    %v151 = vand.u32 %v125, 4294901760
    %152 = vmatpush.msra.mxu0 %v151
    %v153 = vand.u32 %v124, 4294901760
    %154 = vmatpush.msra.mxu0 %v153
    %v155 = vand.u32 %v123, 4294901760
    %156 = vmatpush.msra.mxu0 %v155
    %v157 = vand.u32 %v122, 4294901760
    %158 = vmatpush.msra.mxu0 %v157
    %v159 = vand.u32 %v121, 4294901760
    %160 = vmatpush.msra.mxu0 %v159
    %v161 = vand.u32 %v120, 4294901760
    %162 = vmatpush.msra.mxu0 %v161
    %v163 = vand.u32 %v119, 4294901760
    %164 = vmatpush.msra.mxu0 %v163
    %v165 = vand.u32 %v118, 4294901760
    %166 = vmatpush.msra.mxu0 %v165
    %v167 = vand.u32 %v117, 4294901760
    %168 = vmatpush.msra.mxu0 %v167
    %v169 = vand.u32 %v135, 4294901760
    %v170 = vsub.f32 %v135, %v169
    %v171 = vand.u32 %v170, 4294901760
    %v172 = vsub.f32 %v170, %v171
    %v173 = vand.u32 %v172, 4294901760
    %174 = vmatmul.f32.gmra.mxu0 %v173
    %v175 = vpop.f32.mrf.mxu0
    %v176 = vadd.f32 0.0, %v175
    %v177 = vand.u32 %v136, 4294901760
    %v178 = vsub.f32 %v136, %v177
    %v179 = vand.u32 %v178, 4294901760
    %v180 = vsub.f32 %v178, %v179
    %v181 = vand.u32 %v180, 4294901760
    %182 = vmatmul.f32.gmra.mxu0 %v181
    %v183 = vpop.f32.mrf.mxu0
    %v184 = vadd.f32 0.0, %v183
    %185 = vdwg.mxu0
    %v186 = vand.u32 %v132, 4294901760
    %v187 = vsub.f32 %v132, %v186
    %v188 = vand.u32 %v187, 4294901760
    %v189 = vsub.f32 %v187, %v188
    %v190 = vand.u32 %v189, 4294901760
    %191 = vmatpush.msra.mxu0 %v190
    %v192 = vand.u32 %v131, 4294901760
    %v193 = vsub.f32 %v131, %v192
    %v194 = vand.u32 %v193, 4294901760
    %v195 = vsub.f32 %v193, %v194
    %v196 = vand.u32 %v195, 4294901760
    %197 = vmatpush.msra.mxu0 %v196
    %v198 = vand.u32 %v130, 4294901760
    %v199 = vsub.f32 %v130, %v198
    %v200 = vand.u32 %v199, 4294901760
    %v201 = vsub.f32 %v199, %v200
    %v202 = vand.u32 %v201, 4294901760
    %203 = vmatpush.msra.mxu0 %v202
    %v204 = vand.u32 %v129, 4294901760
    %v205 = vsub.f32 %v129, %v204
    %v206 = vand.u32 %v205, 4294901760
    %v207 = vsub.f32 %v205, %v206
    %v208 = vand.u32 %v207, 4294901760
    %209 = vmatpush.msra.mxu0 %v208
    %v210 = vand.u32 %v128, 4294901760
    %v211 = vsub.f32 %v128, %v210
    %v212 = vand.u32 %v211, 4294901760
    %v213 = vsub.f32 %v211, %v212
    %v214 = vand.u32 %v213, 4294901760
    %215 = vmatpush.msra.mxu0 %v214
    %v216 = vand.u32 %v127, 4294901760
    %v217 = vsub.f32 %v127, %v216
    %v218 = vand.u32 %v217, 4294901760
    %v219 = vsub.f32 %v217, %v218
    %v220 = vand.u32 %v219, 4294901760
    %221 = vmatpush.msra.mxu0 %v220
    %v222 = vand.u32 %v126, 4294901760
    %v223 = vsub.f32 %v126, %v222
    %v224 = vand.u32 %v223, 4294901760
    %v225 = vsub.f32 %v223, %v224
    %v226 = vand.u32 %v225, 4294901760
    %227 = vmatpush.msra.mxu0 %v226
    %v228 = vand.u32 %v125, 4294901760
    %v229 = vsub.f32 %v125, %v228
    %v230 = vand.u32 %v229, 4294901760
    %v231 = vsub.f32 %v229, %v230
    %v232 = vand.u32 %v231, 4294901760
    %233 = vmatpush.msra.mxu0 %v232
    %v234 = vand.u32 %v124, 4294901760
    %v235 = vsub.f32 %v124, %v234
    %v236 = vand.u32 %v235, 4294901760
    %v237 = vsub.f32 %v235, %v236
    %v238 = vand.u32 %v237, 4294901760
    %239 = vmatpush.msra.mxu0 %v238
    %v240 = vand.u32 %v123, 4294901760
    %v241 = vsub.f32 %v123, %v240
    %v242 = vand.u32 %v241, 4294901760
    %v243 = vsub.f32 %v241, %v242
    %v244 = vand.u32 %v243, 4294901760
    %245 = vmatpush.msra.mxu0 %v244
    %v246 = vand.u32 %v122, 4294901760
    %v247 = vsub.f32 %v122, %v246
    %v248 = vand.u32 %v247, 4294901760
    %v249 = vsub.f32 %v247, %v248
    %v250 = vand.u32 %v249, 4294901760
    %251 = vmatpush.msra.mxu0 %v250
    %v252 = vand.u32 %v121, 4294901760
    %v253 = vsub.f32 %v121, %v252
    %v254 = vand.u32 %v253, 4294901760
    %v255 = vsub.f32 %v253, %v254
    %v256 = vand.u32 %v255, 4294901760
    %257 = vmatpush.msra.mxu0 %v256
    %v258 = vand.u32 %v120, 4294901760
    %v259 = vsub.f32 %v120, %v258
    %v260 = vand.u32 %v259, 4294901760
    %v261 = vsub.f32 %v259, %v260
    %v262 = vand.u32 %v261, 4294901760
    %263 = vmatpush.msra.mxu0 %v262
    %v264 = vand.u32 %v119, 4294901760
    %v265 = vsub.f32 %v119, %v264
    %v266 = vand.u32 %v265, 4294901760
    %v267 = vsub.f32 %v265, %v266
    %v268 = vand.u32 %v267, 4294901760
    %269 = vmatpush.msra.mxu0 %v268
    %v270 = vand.u32 %v118, 4294901760
    %v271 = vsub.f32 %v118, %v270
    %v272 = vand.u32 %v271, 4294901760
    %v273 = vsub.f32 %v271, %v272
    %v274 = vand.u32 %v273, 4294901760
    %275 = vmatpush.msra.mxu0 %v274
    %v276 = vand.u32 %v117, 4294901760
    %v277 = vsub.f32 %v117, %v276
    %v278 = vand.u32 %v277, 4294901760
    %v279 = vsub.f32 %v277, %v278
    %v280 = vand.u32 %v279, 4294901760
    %281 = vmatpush.msra.mxu0 %v280
    %v282 = vand.u32 %v135, 4294901760
    %283 = vmatmul.f32.gmra.mxu0 %v282
    %v284 = vpop.f32.mrf.mxu0
    %v285 = vadd.f32 %v176, %v284
    %v286 = vand.u32 %v136, 4294901760
    %287 = vmatmul.f32.gmra.mxu0 %v286
    %v288 = vpop.f32.mrf.mxu0
    %v289 = vadd.f32 %v184, %v288
    %290 = vdwg.mxu0
    %v291 = vand.u32 %v132, 4294901760
    %v292 = vsub.f32 %v132, %v291
    %293 = vmatpush.msra.mxu0 %v292
    %v294 = vand.u32 %v131, 4294901760
    %v295 = vsub.f32 %v131, %v294
    %296 = vmatpush.msra.mxu0 %v295
    %v297 = vand.u32 %v130, 4294901760
    %v298 = vsub.f32 %v130, %v297
    %299 = vmatpush.msra.mxu0 %v298
    %v300 = vand.u32 %v129, 4294901760
    %v301 = vsub.f32 %v129, %v300
    %302 = vmatpush.msra.mxu0 %v301
    %v303 = vand.u32 %v128, 4294901760
    %v304 = vsub.f32 %v128, %v303
    %305 = vmatpush.msra.mxu0 %v304
    %v306 = vand.u32 %v127, 4294901760
    %v307 = vsub.f32 %v127, %v306
    %308 = vmatpush.msra.mxu0 %v307
    %v309 = vand.u32 %v126, 4294901760
    %v310 = vsub.f32 %v126, %v309
    %311 = vmatpush.msra.mxu0 %v310
    %v312 = vand.u32 %v125, 4294901760
    %v313 = vsub.f32 %v125, %v312
    %314 = vmatpush.msra.mxu0 %v313
    %v315 = vand.u32 %v124, 4294901760
    %v316 = vsub.f32 %v124, %v315
    %317 = vmatpush.msra.mxu0 %v316
    %v318 = vand.u32 %v123, 4294901760
    %v319 = vsub.f32 %v123, %v318
    %320 = vmatpush.msra.mxu0 %v319
    %v321 = vand.u32 %v122, 4294901760
    %v322 = vsub.f32 %v122, %v321
    %323 = vmatpush.msra.mxu0 %v322
    %v324 = vand.u32 %v121, 4294901760
    %v325 = vsub.f32 %v121, %v324
    %326 = vmatpush.msra.mxu0 %v325
    %v327 = vand.u32 %v120, 4294901760
    %v328 = vsub.f32 %v120, %v327
    %329 = vmatpush.msra.mxu0 %v328
    %v330 = vand.u32 %v119, 4294901760
    %v331 = vsub.f32 %v119, %v330
    %332 = vmatpush.msra.mxu0 %v331
    %v333 = vand.u32 %v118, 4294901760
    %v334 = vsub.f32 %v118, %v333
    %335 = vmatpush.msra.mxu0 %v334
    %v336 = vand.u32 %v117, 4294901760
    %v337 = vsub.f32 %v117, %v336
    %338 = vmatpush.msra.mxu0 %v337
    %v339 = vand.u32 %v135, 4294901760
    %v340 = vsub.f32 %v135, %v339
    %341 = vmatmul.f32.gmra.mxu0 %v340
    %v342 = vpop.f32.mrf.mxu0
    %v343 = vadd.f32 %v285, %v342
    %v344 = vand.u32 %v136, 4294901760
    %v345 = vsub.f32 %v136, %v344
    %346 = vmatmul.f32.gmra.mxu0 %v345
    %v347 = vpop.f32.mrf.mxu0
    %v348 = vadd.f32 %v289, %v347
    %349 = vdwg.mxu0
    %v350 = vand.u32 %v132, 4294901760
    %351 = vmatpush.msra.mxu0 %v350
    %v352 = vand.u32 %v131, 4294901760
    %353 = vmatpush.msra.mxu0 %v352
    %v354 = vand.u32 %v130, 4294901760
    %355 = vmatpush.msra.mxu0 %v354
    %v356 = vand.u32 %v129, 4294901760
    %357 = vmatpush.msra.mxu0 %v356
    %v358 = vand.u32 %v128, 4294901760
    %359 = vmatpush.msra.mxu0 %v358
    %v360 = vand.u32 %v127, 4294901760
    %361 = vmatpush.msra.mxu0 %v360
    %v362 = vand.u32 %v126, 4294901760
    %363 = vmatpush.msra.mxu0 %v362
    %v364 = vand.u32 %v125, 4294901760
    %365 = vmatpush.msra.mxu0 %v364
    %v366 = vand.u32 %v124, 4294901760
    %367 = vmatpush.msra.mxu0 %v366
    %v368 = vand.u32 %v123, 4294901760
    %369 = vmatpush.msra.mxu0 %v368
    %v370 = vand.u32 %v122, 4294901760
    %371 = vmatpush.msra.mxu0 %v370
    %v372 = vand.u32 %v121, 4294901760
    %373 = vmatpush.msra.mxu0 %v372
    %v374 = vand.u32 %v120, 4294901760
    %375 = vmatpush.msra.mxu0 %v374
    %v376 = vand.u32 %v119, 4294901760
    %377 = vmatpush.msra.mxu0 %v376
    %v378 = vand.u32 %v118, 4294901760
    %379 = vmatpush.msra.mxu0 %v378
    %v380 = vand.u32 %v117, 4294901760
    %381 = vmatpush.msra.mxu0 %v380
    %v382 = vand.u32 %v135, 4294901760
    %v383 = vsub.f32 %v135, %v382
    %v384 = vand.u32 %v383, 4294901760
    %385 = vmatmul.f32.gmra.mxu0 %v384
    %v386 = vpop.f32.mrf.mxu0
    %v387 = vadd.f32 %v343, %v386
    %v388 = vand.u32 %v136, 4294901760
    %v389 = vsub.f32 %v136, %v388
    %v390 = vand.u32 %v389, 4294901760
    %391 = vmatmul.f32.gmra.mxu0 %v390
    %v392 = vpop.f32.mrf.mxu0
    %v393 = vadd.f32 %v348, %v392
    %394 = vdwg.mxu0
    %v395 = vand.u32 %v132, 4294901760
    %v396 = vsub.f32 %v132, %v395
    %v397 = vand.u32 %v396, 4294901760
    %398 = vmatpush.msra.mxu0 %v397
    %v399 = vand.u32 %v131, 4294901760
    %v400 = vsub.f32 %v131, %v399
    %v401 = vand.u32 %v400, 4294901760
    %402 = vmatpush.msra.mxu0 %v401
    %v403 = vand.u32 %v130, 4294901760
    %v404 = vsub.f32 %v130, %v403
    %v405 = vand.u32 %v404, 4294901760
    %406 = vmatpush.msra.mxu0 %v405
    %v407 = vand.u32 %v129, 4294901760
    %v408 = vsub.f32 %v129, %v407
    %v409 = vand.u32 %v408, 4294901760
    %410 = vmatpush.msra.mxu0 %v409
    %v411 = vand.u32 %v128, 4294901760
    %v412 = vsub.f32 %v128, %v411
    %v413 = vand.u32 %v412, 4294901760
    %414 = vmatpush.msra.mxu0 %v413
    %v415 = vand.u32 %v127, 4294901760
    %v416 = vsub.f32 %v127, %v415
    %v417 = vand.u32 %v416, 4294901760
    %418 = vmatpush.msra.mxu0 %v417
    %v419 = vand.u32 %v126, 4294901760
    %v420 = vsub.f32 %v126, %v419
    %v421 = vand.u32 %v420, 4294901760
    %422 = vmatpush.msra.mxu0 %v421
    %v423 = vand.u32 %v125, 4294901760
    %v424 = vsub.f32 %v125, %v423
    %v425 = vand.u32 %v424, 4294901760
    %426 = vmatpush.msra.mxu0 %v425
    %v427 = vand.u32 %v124, 4294901760
    %v428 = vsub.f32 %v124, %v427
    %v429 = vand.u32 %v428, 4294901760
    %430 = vmatpush.msra.mxu0 %v429
    %v431 = vand.u32 %v123, 4294901760
    %v432 = vsub.f32 %v123, %v431
    %v433 = vand.u32 %v432, 4294901760
    %434 = vmatpush.msra.mxu0 %v433
    %v435 = vand.u32 %v122, 4294901760
    %v436 = vsub.f32 %v122, %v435
    %v437 = vand.u32 %v436, 4294901760
    %438 = vmatpush.msra.mxu0 %v437
    %v439 = vand.u32 %v121, 4294901760
    %v440 = vsub.f32 %v121, %v439
    %v441 = vand.u32 %v440, 4294901760
    %442 = vmatpush.msra.mxu0 %v441
    %v443 = vand.u32 %v120, 4294901760
    %v444 = vsub.f32 %v120, %v443
    %v445 = vand.u32 %v444, 4294901760
    %446 = vmatpush.msra.mxu0 %v445
    %v447 = vand.u32 %v119, 4294901760
    %v448 = vsub.f32 %v119, %v447
    %v449 = vand.u32 %v448, 4294901760
    %450 = vmatpush.msra.mxu0 %v449
    %v451 = vand.u32 %v118, 4294901760
    %v452 = vsub.f32 %v118, %v451
    %v453 = vand.u32 %v452, 4294901760
    %454 = vmatpush.msra.mxu0 %v453
    %v455 = vand.u32 %v117, 4294901760
    %v456 = vsub.f32 %v117, %v455
    %v457 = vand.u32 %v456, 4294901760
    %458 = vmatpush.msra.mxu0 %v457
    %v459 = vand.u32 %v135, 4294901760
    %460 = vmatmul.f32.gmra.mxu0 %v459
    %v461 = vpop.f32.mrf.mxu0
    %v462 = vadd.f32 %v387, %v461
    %v463 = vand.u32 %v136, 4294901760
    %464 = vmatmul.f32.gmra.mxu0 %v463
    %v465 = vpop.f32.mrf.mxu0
    %v466 = vadd.f32 %v393, %v465
    %467 = vdwg.mxu0
    %v468 = vand.u32 %v132, 4294901760
    %469 = vmatpush.msra.mxu0 %v468
    %v470 = vand.u32 %v131, 4294901760
    %471 = vmatpush.msra.mxu0 %v470
    %v472 = vand.u32 %v130, 4294901760
    %473 = vmatpush.msra.mxu0 %v472
    %v474 = vand.u32 %v129, 4294901760
    %475 = vmatpush.msra.mxu0 %v474
    %v476 = vand.u32 %v128, 4294901760
    %477 = vmatpush.msra.mxu0 %v476
    %v478 = vand.u32 %v127, 4294901760
    %479 = vmatpush.msra.mxu0 %v478
    %v480 = vand.u32 %v126, 4294901760
    %481 = vmatpush.msra.mxu0 %v480
    %v482 = vand.u32 %v125, 4294901760
    %483 = vmatpush.msra.mxu0 %v482
    %v484 = vand.u32 %v124, 4294901760
    %485 = vmatpush.msra.mxu0 %v484
    %v486 = vand.u32 %v123, 4294901760
    %487 = vmatpush.msra.mxu0 %v486
    %v488 = vand.u32 %v122, 4294901760
    %489 = vmatpush.msra.mxu0 %v488
    %v490 = vand.u32 %v121, 4294901760
    %491 = vmatpush.msra.mxu0 %v490
    %v492 = vand.u32 %v120, 4294901760
    %493 = vmatpush.msra.mxu0 %v492
    %v494 = vand.u32 %v119, 4294901760
    %495 = vmatpush.msra.mxu0 %v494
    %v496 = vand.u32 %v118, 4294901760
    %497 = vmatpush.msra.mxu0 %v496
    %v498 = vand.u32 %v117, 4294901760
    %499 = vmatpush.msra.mxu0 %v498
    %v500 = vand.u32 %v135, 4294901760
    %501 = vmatmul.f32.gmra.mxu0 %v500
    %v502 = vpop.f32.mrf.mxu0
    %v503 = vadd.f32 %v462, %v502
    %v504 = vand.u32 %v136, 4294901760
    %505 = vmatmul.f32.gmra.mxu0 %v504
    %v506 = vpop.f32.mrf.mxu0
    %v507 = vadd.f32 %v466, %v506
    %508 = vdwg.mxu0
    %v509 = vadd.f32 %v133, %v503
    %v510 = vadd.f32 %v134, %v507
    %511 = vst [vmem:[#allocation2] sm:$0xff] %v509
    %512 = vst [vmem:[#allocation2 + $0x8] sm:$0xff] %v510
    // Predicated region
    $region22: #{tpu_custom_call.1} parent=1 // pred_check
      %p513 = pneg %p42
    $region23: #{tpu_custom_call.1} parent=1 // pred_check_branch
      %515 = sbr.rel (%p513) target = $region25
    $region24: #{tpu_custom_call.1} parent=1 // pred_region
      %v516 = vld [vmem:[#allocation2] sm:$0xff]
      %v517 = vld [vmem:[#allocation2 + $0x8] sm:$0xff]
      %518 = vst [vmem:[#allocation8] sm:$0xff] %v516
      %519 = vst [vmem:[#allocation8 + $0x8] sm:$0xff] %v517
    $region25: #{tpu_custom_call.1} parent=1 // pred_fallthru
      _
    // Predicated region
    $region26: #{tpu_custom_call.1} parent=1 // pred_check
      _
    $region27: #{tpu_custom_call.1} parent=1 // pred_check_branch
      %521 = sbr.rel (0) target = $region29
    $region28: #{tpu_custom_call.1} parent=1 // pred_region
      %523 = vsyncadd [#allocation5], 0
      %s524 = sshll.u32 [#allocation8], 4
      %s525 = int_to_ptr.vmem [resolvable:$true] %s524
      %s526 = sshll.u32 %s2, 4
      %s527 = int_to_ptr.hbm [resolvable:$true] %s526
      %532 = dma.vmem_to_hbm [thread:$0]  %s525, 256, %s527, [#allocation5], 128, 128, 8
    $region29: #{tpu_custom_call.1} parent=1 // pred_fallthru
      _
    // Predicated region
    $region30: #{tpu_custom_call.1} parent=1 // pred_check
      _
    $region31: #{tpu_custom_call.1} parent=1 // pred_check_branch
      %534 = sbr.rel (0) target = $region33
    $region32: #{tpu_custom_call.1} parent=1 // pred_region
      %536 = dma.done [#allocation5], 256
    $region33: #{tpu_custom_call.1} parent=1 // pred_fallthru
      _
    %537 = vsyncpa [#allocation4], 1
    %538 = vsyncpa [#allocation7], 1
    %539 = vsyncpa [#allocation5], 1

</llo_original>
